<compile_context>
chip_gen: v7x
topology: tpu7x:2x2x1
jax: 0.10.0
libtpu: 0.0.40
codegen_flags: <defaults>
</compile_context>

<pallas_src>
import functools
import math

import jax
import jax.numpy as jnp
import numpy as np
from jax import lax
from jax.experimental import pallas as pl
from jax.experimental.pallas import tpu as pltpu

MARGIN = 0.05
EPS = 1e-08


def _asym_ce_kernel(x_ref, y_ref, out_ref, *, margin, eps, n_rows, row_block,
                    binary):
    x = x_ref[...]
    if x.dtype != jnp.float32:
        x = x.astype(jnp.float32)

    if binary:
        # Binary targets {0,1}: one select + one log instead of two logs.
        pos = y_ref[...] > 0.5
        if margin is not None and margin > 0:
            p = jax.nn.sigmoid(x)
            q = jnp.minimum((1.0 - p) + margin, 1.0)   # (xs_neg + m).clamp(max=1)
            loss = jnp.log(jnp.maximum(jnp.where(pos, p, q), eps))
        else:
            # margin == 0: both branches are log(sigmoid(+/-x)); stable
            # log-sigmoid costs 2 EUP ops/elem, eps clamp folded via max.
            t = jnp.where(pos, x, -x)
            log_sig = jnp.minimum(t, 0.0) - jnp.log1p(jnp.exp(-jnp.abs(t)))
            loss = jnp.maximum(log_sig, math.log(eps))
    else:
        # Soft-target fallback: exact original formula.
        y = y_ref[...].astype(jnp.float32)
        p = jax.nn.sigmoid(x)
        q = 1.0 - p
        if margin is not None and margin > 0:
            q = jnp.minimum(q + margin, 1.0)
        loss = (y * jnp.log(jnp.maximum(p, eps))
                + (1.0 - y) * jnp.log(jnp.maximum(q, eps)))

    # Ragged tail: mask rows past the true row count (statically skipped when
    # N divides evenly).  where() also quashes any garbage from the clamped
    # out-of-bounds block read.
    if n_rows % row_block != 0:
        row_start = pl.program_id(0) * row_block
        row_ids = row_start + lax.broadcasted_iota(jnp.int32, (row_block, 1), 0)
        loss = jnp.where(row_ids < n_rows, loss, 0.0)

    # Sublane-group reduce (row_block, C) -> (8, C): pure VPU adds, and the
    # output store is a full unmasked (8, C) block.
    c = loss.shape[-1]
    partial = jnp.sum(loss.reshape(row_block // 8, 8, c), axis=0)
    out_ref[...] = -partial


def _default_tile_bytes():
    # Per-tile budget for the f32 logits block.  v6e/v7x: 32 MiB default
    # scoped VMEM -> 6 MiB x-tile (double-buffered x + y f32 ~ 24 MiB).
    # v5e: only 16 MiB default -> cap at 3 MiB (~12 MiB double-buffered).
    try:
        kind = jax.devices()[0].device_kind.lower()
    except Exception:
        kind = ""
    if "v5 lite" in kind or "v5e" in kind or "v5litepod" in kind:
        return 3 * 1024 * 1024
    return 6 * 1024 * 1024


def asymmetric_ce_loss(x, y, *, margin=MARGIN, eps=EPS, binary_targets=True,
                       row_block=None):
    """Pallas implementation of AsymmetricCELoss.forward. Returns a scalar.

    Set binary_targets=False if y may contain soft / label-smoothed values.
    """
    assert x.shape == y.shape and x.ndim == 2
    n, c = x.shape

    if row_block is None:
        itemsize = jnp.dtype(x.dtype).itemsize
        rb = max(8, _default_tile_bytes() // (itemsize * c))
        row_block = max(8, (rb // 8) * 8)
    # Never tile larger than the (8-padded) row count.
    row_block = min(row_block, max(8, ((n + 7) // 8) * 8))
    assert row_block % 8 == 0

    num_blocks = pl.cdiv(n, row_block)
    kernel = functools.partial(_asym_ce_kernel, margin=margin, eps=eps,
                               n_rows=n, row_block=row_block,
                               binary=binary_targets)

    partials = pl.pallas_call(
        kernel,
        out_shape=jax.ShapeDtypeStruct((num_blocks * 8, c), jnp.float32),
        grid_spec=pltpu.PrefetchScalarGridSpec(
            num_scalar_prefetch=0,
            grid=(num_blocks,),
            in_specs=[
                pl.BlockSpec((row_block, c), lambda i: (i, 0)),
                pl.BlockSpec((row_block, c), lambda i: (i, 0)),
            ],
            out_specs=pl.BlockSpec((8, c), lambda i: (i, 0)),
        ),
        compiler_params=pltpu.CompilerParams(
            dimension_semantics=("parallel",),   # independent blocks -> megacore OK
        ),
    )(x, y)

    # Final reduction of the tiny (num_blocks*8, C) partial-sum slab.
    return jnp.sum(partials)


def _reference(x, y, margin=MARGIN, eps=EPS):
    xs_pos = jax.nn.sigmoid(x)
    xs_neg = 1.0 - xs_pos
    if margin is not None and margin > 0:
        xs_neg = jnp.minimum(xs_neg + margin, 1.0)
    los_pos = y * jnp.log(jnp.maximum(xs_pos, eps))
    los_neg = (1.0 - y) * jnp.log(jnp.maximum(xs_neg, eps))
    return -(los_pos + los_neg).sum()


if __name__ == "__main__":
    key = jax.random.PRNGKey(0)
    kx, ky = jax.random.split(key)

    # batch=8 examples, 128 labels (multi-label binarized targets)
    N, C = 8, 128
    x = jax.random.normal(kx, (N, C), dtype=jnp.float32) * 2.0       # logits
    y = (jax.random.uniform(ky, (N, C)) > 0.5).astype(jnp.float32)   # binary targets

    loss = jax.block_until_ready(asymmetric_ce_loss(x, y))
    ref = jax.block_until_ready(_reference(x, y))
    np.testing.assert_allclose(np.asarray(loss), np.asarray(ref), rtol=1e-5, atol=1e-4)

    # Ragged row count exercises the in-kernel tail mask (no concatenate pad).
    N2 = 13
    x2 = jax.random.normal(jax.random.PRNGKey(1), (N2, C), dtype=jnp.float32) * 2.0
    y2 = (jax.random.uniform(jax.random.PRNGKey(2), (N2, C)) > 0.5).astype(jnp.float32)
    loss2 = jax.block_until_ready(asymmetric_ce_loss(x2, y2))
    ref2 = jax.block_until_ready(_reference(x2, y2))
    np.testing.assert_allclose(np.asarray(loss2), np.asarray(ref2), rtol=1e-5, atol=1e-4)

    print("KERNEL_OK")
</pallas_src>

<mosaic_0001>
module attributes {stable_mosaic.version = 11 : i64} {
  func.func @_asym_ce_kernel(%arg0: i32, %arg1: memref<8x128xf32, #tpu.memory_space<vmem>>, %arg2: memref<8x128xf32, #tpu.memory_space<vmem>>, %arg3: memref<8x128xf32, #tpu.memory_space<vmem>>) attributes {dimension_semantics = [#tpu.dimension_semantics<parallel>], iteration_bounds = array<i64: 1>, scalar_prefetch = 0 : i64, scratch_operands = 0 : i64, tpu.core_type = #tpu.core_type<tc>, window_params = [{transform_indices = @transform_0, window_bounds = array<i64: 8, 128>}, {transform_indices = @transform_1, window_bounds = array<i64: 8, 128>}, {transform_indices = @transform_2, window_bounds = array<i64: 8, 128>}]} {
    %c0 = arith.constant 0 : index
    %c0_0 = arith.constant 0 : index
    %0 = vector.load %arg1[%c0, %c0_0] : memref<8x128xf32, #tpu.memory_space<vmem>>, vector<8x128xf32>
    %c0_1 = arith.constant 0 : index
    %c0_2 = arith.constant 0 : index
    %1 = vector.load %arg2[%c0_1, %c0_2] : memref<8x128xf32, #tpu.memory_space<vmem>>, vector<8x128xf32>
    %cst = arith.constant 5.000000e-01 : f32
    %2 = vector.broadcast %cst : f32 to vector<8x128xf32>
    %3 = arith.cmpf ogt, %1, %2 : vector<8x128xf32>
    %4 = arith.negf %0 : vector<8x128xf32>
    %5 = math.exp %4 : vector<8x128xf32>
    %cst_3 = arith.constant 1.000000e+00 : f32
    %6 = vector.broadcast %cst_3 : f32 to vector<8x128xf32>
    %7 = arith.addf %6, %5 : vector<8x128xf32>
    %8 = arith.divf %6, %7 : vector<8x128xf32>
    %cst_4 = arith.constant 1.000000e+00 : f32
    %9 = vector.broadcast %cst_4 : f32 to vector<8x128xf32>
    %10 = arith.subf %9, %8 : vector<8x128xf32>
    %cst_5 = arith.constant 5.000000e-02 : f32
    %11 = vector.broadcast %cst_5 : f32 to vector<8x128xf32>
    %12 = arith.addf %10, %11 : vector<8x128xf32>
    %cst_6 = arith.constant 1.000000e+00 : f32
    %13 = vector.broadcast %cst_6 : f32 to vector<8x128xf32>
    %14 = arith.minimumf %12, %13 : vector<8x128xf32>
    %15 = arith.select %3, %8, %14 : vector<8x128xi1>, vector<8x128xf32>
    %cst_7 = arith.constant 9.99999993E-9 : f32
    %16 = vector.broadcast %cst_7 : f32 to vector<8x128xf32>
    %17 = arith.maximumf %15, %16 : vector<8x128xf32>
    %18 = math.log %17 : vector<8x128xf32>
    %19 = vector.shape_cast %18 : vector<8x128xf32> to vector<1x8x128xf32>
    %cst_8 = arith.constant dense<0.000000e+00> : vector<8x128xf32>
    %20 = vector.multi_reduction <add>, %19, %cst_8 [0] : vector<1x8x128xf32> to vector<8x128xf32>
    %cst_9 = arith.constant 0.000000e+00 : f32
    %21 = vector.broadcast %cst_9 : f32 to vector<8x128xf32>
    %22 = arith.subf %21, %20 : vector<8x128xf32>
    %c0_10 = arith.constant 0 : index
    %c0_11 = arith.constant 0 : index
    %23 = vector.load %arg3[%c0_10, %c0_11] : memref<8x128xf32, #tpu.memory_space<vmem>>, vector<8x128xf32>
    tpu.vector_store %arg3[%c0_10, %c0_11], %22 {strides = array<i32>} : memref<8x128xf32, #tpu.memory_space<vmem>>, vector<8x128xf32>,
    return
  }
  func.func @transform_0(%arg0: i32) -> (i32, i32) {
    %c0_i32 = arith.constant 0 : i32
    %c0_i32_0 = arith.constant 0 : i32
    return %arg0, %c0_i32 : i32, i32
  }
  func.func @transform_1(%arg0: i32) -> (i32, i32) {
    %c0_i32 = arith.constant 0 : i32
    %c0_i32_0 = arith.constant 0 : i32
    return %arg0, %c0_i32 : i32, i32
  }
  func.func @transform_2(%arg0: i32) -> (i32, i32) {
    %c0_i32 = arith.constant 0 : i32
    %c0_i32_0 = arith.constant 0 : i32
    return %arg0, %c0_i32 : i32, i32
  }
}

</mosaic_0001>

<llo_original>
// kernel: tpu_custom_call.1
$region0: #{tpu_custom_call.1}
  #allocation0 [shape = 'u32[]', space=smem, size = 0x4, offset = 0x4, fixed_abs, tag = 'smem constant byte address 0x4 - core index']
  #allocation1 [shape = 'u32[144,128]{1,0:T(1,128)}', space=vmem, size = 0x12000, scoped, tag = 'internal scratch']
  %s0 = inlined_call_operand.hbm [shape: f32[8,128], index: 0, kind: input, shape index: {}]
  %s1 = inlined_call_operand.hbm [shape: f32[8,128], index: 1, kind: input, shape index: {}]
  %s2 = inlined_call_operand.hbm [shape: f32[8,128], index: 2, kind: output, shape index: {}]
  %s3 = sld [smem:[#allocation0]]
  $region26: #{tpu_custom_call.1} parent=0
    _
  %s5 = ssub.s32 1, %s3
  %s6 = scalar_select 0, %s5, %s3
  $region1: #{tpu_custom_call.1} parent=0
    #allocation2 [shape = 'u8[4096]{0}', space=vmem, size = 0x1000, scoped, tag = 'input window, operand 0, single buffered']
    #allocation3 [shape = 's32[1]{0}', space=sflag, size = 0x4, scoped, tag = 'scoped memory for tpu_custom_call.1']
    #allocation4 [shape = 's32[1]{0}', space=sflag, size = 0x4, scoped, tag = 'scoped memory for tpu_custom_call.1']
    #allocation5 [shape = 'u8[4096]{0}', space=vmem, size = 0x1000, scoped, tag = 'input window, operand 1, single buffered']
    #allocation6 [shape = 's32[1]{0}', space=sflag, size = 0x4, scoped, tag = 'scoped memory for tpu_custom_call.1']
    #allocation7 [shape = 'u8[4096]{0}', space=vmem, size = 0x1000, scoped, tag = 'output window, operand 0, single buffered']
    %7 = vsyncpa [#allocation3], 0
    %8 = vsyncpa [#allocation6], 0
    %9 = vsyncpa [#allocation4], 0
    // Predicated region
    $region2: #{tpu_custom_call.1} parent=1 // pred_check
      _
    $region3: #{tpu_custom_call.1} parent=1 // pred_check_branch
      %11 = sbr.rel (0) target = $region5
    $region4: #{tpu_custom_call.1} parent=1 // pred_region
      %s13 = ssub.s32 128, 128
      %14 = vsyncadd [#allocation3], %s13
      %s16 = sshll.u32 [#allocation2], 4
      %s17 = int_to_ptr.vmem [resolvable:$true] %s16
      %19 = dma.hbm_to_vmem [thread:$0]  %s0, 128, %s17, [#allocation3]
    $region5: #{tpu_custom_call.1} parent=1 // pred_fallthru
      _
    // Predicated region
    $region6: #{tpu_custom_call.1} parent=1 // pred_check
      _
    $region7: #{tpu_custom_call.1} parent=1 // pred_check_branch
      %21 = sbr.rel (0) target = $region9
    $region8: #{tpu_custom_call.1} parent=1 // pred_region
      %s23 = ssub.s32 128, 128
      %24 = vsyncadd [#allocation6], %s23
      %s26 = sshll.u32 [#allocation5], 4
      %s27 = int_to_ptr.vmem [resolvable:$true] %s26
      %29 = dma.hbm_to_vmem [thread:$0]  %s1, 128, %s27, [#allocation6]
    $region9: #{tpu_custom_call.1} parent=1 // pred_fallthru
      _
    // Predicated region
    $region10: #{tpu_custom_call.1} parent=1 // pred_check
      _
    $region11: #{tpu_custom_call.1} parent=1 // pred_check_branch
      %31 = sbr.rel (0) target = $region13
    $region12: #{tpu_custom_call.1} parent=1 // pred_region
      %32 = dma.done [#allocation3], 128
    $region13: #{tpu_custom_call.1} parent=1 // pred_fallthru
      _
    // Predicated region
    $region14: #{tpu_custom_call.1} parent=1 // pred_check
      _
    $region15: #{tpu_custom_call.1} parent=1 // pred_check_branch
      %34 = sbr.rel (0) target = $region17
    $region16: #{tpu_custom_call.1} parent=1 // pred_region
      %35 = dma.done [#allocation6], 128
    $region17: #{tpu_custom_call.1} parent=1 // pred_fallthru
      _
    %v36 = vld [vmem:[#allocation2] sm:$0xff]
    %v37 = vld [vmem:[#allocation5] sm:$0xff]
    %vm38 = vcmp.gt.f32.partialorder %v37, 0.5
    %v39 = vxor.u32 %v36, 2147483648
    %v40 = vmul.f32 %v39, 1.442695
    %v41 = vpow.pop %v40
    %v42 = vadd.f32 %v41, 1.0
    %v43 = vrcp.pop %v42
    %v44 = vmul.f32 1.0, %v43
    %v45 = vsub.f32 1.0, %v44
    %v46 = vadd.f32 %v45, 0.05
    %v47 = vmin.f32 %v46, 1.0
    %v48 = vsel %vm38, %v44, %v47
    %v49 = vmax.f32 %v48, 1e-08
    %v50 = vlog2.pop %v49
    %v51 = vmul.f32 %v50, 0.6931472
    %v52 = vadd.f32 %v51, 0.0
    %v53 = vsub.f32 0.0, %v52
    %54 = vst [vmem:[#allocation7] sm:$0xff] %v53
    // Predicated region
    $region18: #{tpu_custom_call.1} parent=1 // pred_check
      _
    $region19: #{tpu_custom_call.1} parent=1 // pred_check_branch
      %56 = sbr.rel (0) target = $region21
    $region20: #{tpu_custom_call.1} parent=1 // pred_region
      %s58 = ssub.s32 128, 128
      %59 = vsyncadd [#allocation4], %s58
      %s61 = sshll.u32 [#allocation7], 4
      %s62 = int_to_ptr.vmem [resolvable:$true] %s61
      %64 = dma.vmem_to_hbm [thread:$0]  %s62, 128, %s2, [#allocation4]
    $region21: #{tpu_custom_call.1} parent=1 // pred_fallthru
      _
    // Predicated region
    $region22: #{tpu_custom_call.1} parent=1 // pred_check
      _
    $region23: #{tpu_custom_call.1} parent=1 // pred_check_branch
      %66 = sbr.rel (0) target = $region25
    $region24: #{tpu_custom_call.1} parent=1 // pred_region
      %67 = dma.done [#allocation4], 128
    $region25: #{tpu_custom_call.1} parent=1 // pred_fallthru
      _
    %68 = vsyncpa [#allocation3], 1
    %69 = vsyncpa [#allocation6], 1
    %70 = vsyncpa [#allocation4], 1

</llo_original>
